<compile_context>
chip_gen: v7x
topology: tpu7x:2x2x1
jax: 0.10.0
libtpu: 0.0.40
codegen_flags: <defaults>
</compile_context>

<pallas_src>
import jax
import jax.numpy as jnp
from jax.experimental import pallas as pl
from jax.experimental.pallas import tpu as pltpu


def _round_up(x, m):
    return ((x + m - 1) // m) * m


def _num_tensorcores():
    """Best-effort TensorCores-per-chip (v7x = 2, earlier generations = 1)."""
    try:
        kind = jax.devices()[0].device_kind.lower()
        if "v7" in kind:
            return 2
    except Exception:
        pass
    try:
        n = getattr(jax.devices()[0], "num_cores", None)
        if n:
            return int(n)
    except Exception:
        pass
    return 1


def dqn_kernel(x_ref, w1_ref, b1_ref, w2_ref, b2_ref, w3_ref, b3_ref, o_ref):
    """Fused 3-layer MLP with ReLU. All operands are full VMEM tiles.

    Dots accumulate in f32 regardless of operand dtype; biases/ReLU are f32;
    activations are cast back to the weight dtype only as the next MXU operand
    (a no-op in the pure-f32 path)."""
    h1 = jnp.dot(x_ref[...], w1_ref[...], preferred_element_type=jnp.float32) + b1_ref[...]
    h1 = jnp.maximum(h1, 0.0).astype(w2_ref.dtype)

    h2 = jnp.dot(h1, w2_ref[...], preferred_element_type=jnp.float32) + b2_ref[...]
    h2 = jnp.maximum(h2, 0.0).astype(w3_ref.dtype)

    out = jnp.dot(h2, w3_ref[...], preferred_element_type=jnp.float32) + b3_ref[...]
    o_ref[...] = out.astype(o_ref.dtype)


def prepare_params(params, param_dtype=jnp.bfloat16):
    """One-time weight reformatting (call at init / after optimizer step, NOT per forward):
    weight matrices -> MXU operand dtype (bf16 recommended), biases stay f32."""
    w1, b1, w2, b2, w3, b3 = params
    return (
        w1.astype(param_dtype), b1.astype(jnp.float32),
        w2.astype(param_dtype), b2.astype(jnp.float32),
        w3.astype(param_dtype), b3.astype(jnp.float32),
    )


def dqn_forward(x, params, *, max_block_b=256, num_cores=None):
    """Run the fused DQN MLP: returns Q-values of shape (B, output_dim) in f32.

    Tiles over the batch dimension only; weights/biases stay fully VMEM-resident
    (constant index_map) for every grid step. x is cast to the weight operand
    dtype (f32 or bf16 depending on how `params` were prepared); accumulation and
    the bias/ReLU chain are always f32.
    """
    w1, b1, w2, b2, w3, b3 = params
    B, input_dim = x.shape
    hidden = w1.shape[1]
    output_dim = w3.shape[1]
    assert w1.shape == (input_dim, hidden)
    assert w2.shape == (hidden, hidden)
    assert w3.shape == (hidden, output_dim)

    # x rides the MXU at the weight operand dtype (tiny cast, few KB).
    x = x.astype(w1.dtype)

    # --- batch tiling: 1 step on single-TC chips, >=2 even "parallel" steps on v7x ---
    if num_cores is None:
        num_cores = _num_tensorcores()
    if num_cores <= 1 or B <= 8:
        block_b = min(max_block_b, B)
    else:
        block_b = min(max_block_b, _round_up(pl.cdiv(B, num_cores), 8))
    block_b = max(1, min(block_b, B))
    grid = (pl.cdiv(B, block_b),)

    full = lambda r, c: pl.BlockSpec((r, c), lambda i: (0, 0))  # resident weight tile

    itemsize = lambda a: jnp.dtype(a.dtype).itemsize
    flops = 2 * B * (input_dim * hidden + hidden * hidden + hidden * output_dim)
    bytes_accessed = (
        x.size * itemsize(x)
        + w1.size * itemsize(w1) + w2.size * itemsize(w2) + w3.size * itemsize(w3)
        + (b1.size + b2.size + b3.size) * 4
        + B * output_dim * 4
    )

    return pl.pallas_call(
        dqn_kernel,
        out_shape=jax.ShapeDtypeStruct((B, output_dim), jnp.float32),
        grid_spec=pltpu.PrefetchScalarGridSpec(
            num_scalar_prefetch=0,
            grid=grid,
            in_specs=[
                pl.BlockSpec((block_b, input_dim), lambda i: (i, 0)),  # x tile
                full(input_dim, hidden),   # w1
                full(1, hidden),           # b1
                full(hidden, hidden),      # w2
                full(1, hidden),           # b2
                full(hidden, output_dim),  # w3
                full(1, output_dim),       # b3
            ],
            out_specs=pl.BlockSpec((block_b, output_dim), lambda i: (i, 0)),
        ),
        compiler_params=pltpu.CompilerParams(
            dimension_semantics=("parallel",),
        ),
        cost_estimate=pl.CostEstimate(
            flops=flops, transcendentals=0, bytes_accessed=bytes_accessed
        ),
    )(x, w1, b1, w2, b2, w3, b3)


def init_params(key, input_dim, hidden, output_dim):
    """Deterministic init mimicking PyTorch nn.Linear default (U[-1/sqrt(fan_in), 1/sqrt(fan_in)]).
    Weights stored as (in_features, out_features) so the kernel computes x @ W + b."""
    ks = jax.random.split(key, 6)

    def linear(kw, kb, fan_in, fan_out):
        bound = 1.0 / jnp.sqrt(fan_in)
        w = jax.random.uniform(kw, (fan_in, fan_out), jnp.float32, -bound, bound)
        b = jax.random.uniform(kb, (1, fan_out), jnp.float32, -bound, bound)
        return w, b

    w1, b1 = linear(ks[0], ks[1], input_dim, hidden)
    w2, b2 = linear(ks[2], ks[3], hidden, hidden)
    w3, b3 = linear(ks[4], ks[5], hidden, output_dim)
    return (w1, b1, w2, b2, w3, b3)


def dqn_ref(x, params):
    """Pure-JAX reference for correctness check."""
    w1, b1, w2, b2, w3, b3 = params
    h1 = jnp.maximum(x @ w1 + b1, 0.0)
    h2 = jnp.maximum(h1 @ w2 + b2, 0.0)
    return h2 @ w3 + b3


if __name__ == "__main__":
    key = jax.random.PRNGKey(0)
    k_x, k_p = jax.random.split(key)

    batch = 32        # small replay-buffer-style batch
    input_dim = 8     # small observation vector
    hidden = 128      # nn.Linear(input_dim, 128) / nn.Linear(128, 128)
    output_dim = 4    # number of actions

    x = jax.random.normal(k_x, (batch, input_dim), dtype=jnp.float32)
    params = init_params(k_p, input_dim, hidden, output_dim)
    ref = dqn_ref(x, params)

    # f32-operand path (exact-ish).
    out_f32 = jax.block_until_ready(dqn_forward(x, params))
    assert out_f32.shape == (batch, output_dim)
    assert jnp.allclose(out_f32, ref, atol=1e-5, rtol=1e-5), "f32 mismatch vs reference"

    # bf16-operand path (MXU-native on v5e/v6e/v7x); weights cast ONCE, f32 accumulation.
    params_bf16 = prepare_params(params, jnp.bfloat16)
    out_bf16 = jax.block_until_ready(dqn_forward(x, params_bf16))
    assert out_bf16.shape == (batch, output_dim)
    assert jnp.allclose(out_bf16, ref, atol=5e-2, rtol=5e-2), "bf16 mismatch vs reference"

    print("KERNEL_OK")
</pallas_src>

<mosaic_0001>
module attributes {stable_mosaic.version = 11 : i64} {
  func.func @dqn_kernel(%arg0: i32, %arg1: memref<32x8xf32, #tpu.memory_space<vmem>>, %arg2: memref<8x128xf32, #tpu.memory_space<vmem>>, %arg3: memref<1x128xf32, #tpu.memory_space<vmem>>, %arg4: memref<128x128xf32, #tpu.memory_space<vmem>>, %arg5: memref<1x128xf32, #tpu.memory_space<vmem>>, %arg6: memref<128x4xf32, #tpu.memory_space<vmem>>, %arg7: memref<1x4xf32, #tpu.memory_space<vmem>>, %arg8: memref<32x4xf32, #tpu.memory_space<vmem>>) attributes {dimension_semantics = [#tpu.dimension_semantics<parallel>], iteration_bounds = array<i64: 1>, scalar_prefetch = 0 : i64, scratch_operands = 0 : i64, tpu.core_type = #tpu.core_type<tc>, window_params = [{transform_indices = @transform_0, window_bounds = array<i64: 32, 8>}, {pipeline_mode = #tpu.pipeline_mode<synchronous>, transform_indices = @transform_1, window_bounds = array<i64: 8, 128>}, {pipeline_mode = #tpu.pipeline_mode<synchronous>, transform_indices = @transform_2, window_bounds = array<i64: 1, 128>}, {pipeline_mode = #tpu.pipeline_mode<synchronous>, transform_indices = @transform_3, window_bounds = array<i64: 128, 128>}, {pipeline_mode = #tpu.pipeline_mode<synchronous>, transform_indices = @transform_4, window_bounds = array<i64: 1, 128>}, {pipeline_mode = #tpu.pipeline_mode<synchronous>, transform_indices = @transform_5, window_bounds = array<i64: 128, 4>}, {pipeline_mode = #tpu.pipeline_mode<synchronous>, transform_indices = @transform_6, window_bounds = array<i64: 1, 4>}, {transform_indices = @transform_7, window_bounds = array<i64: 32, 4>}]} {
    %c0 = arith.constant 0 : index
    %c0_0 = arith.constant 0 : index
    %0 = vector.load %arg1[%c0, %c0_0] : memref<32x8xf32, #tpu.memory_space<vmem>>, vector<32x8xf32>
    %c0_1 = arith.constant 0 : index
    %c0_2 = arith.constant 0 : index
    %1 = vector.load %arg2[%c0_1, %c0_2] : memref<8x128xf32, #tpu.memory_space<vmem>>, vector<8x128xf32>
    %cst = arith.constant dense<0.000000e+00> : vector<32x128xf32>
    %2 = tpu.matmul %0, %1, %cst {dimension_numbers = #tpu.dot_dimension_numbers<[1], [0], [0], [1], [0, 0, 1, 1], [], []>} : vector<32x8xf32>, vector<8x128xf32>, vector<32x128xf32> -> vector<32x128xf32>
    %c0_3 = arith.constant 0 : index
    %c0_4 = arith.constant 0 : index
    %3 = vector.load %arg3[%c0_3, %c0_4] : memref<1x128xf32, #tpu.memory_space<vmem>>, vector<1x128xf32>
    %4 = vector.broadcast %3 : vector<1x128xf32> to vector<32x128xf32>
    %5 = arith.addf %2, %4 : vector<32x128xf32>
    %cst_5 = arith.constant 0.000000e+00 : f32
    %6 = vector.broadcast %cst_5 : f32 to vector<32x128xf32>
    %7 = arith.maximumf %5, %6 : vector<32x128xf32>
    %c0_6 = arith.constant 0 : index
    %c0_7 = arith.constant 0 : index
    %8 = vector.load %arg4[%c0_6, %c0_7] : memref<128x128xf32, #tpu.memory_space<vmem>>, vector<128x128xf32>
    %cst_8 = arith.constant dense<0.000000e+00> : vector<32x128xf32>
    %9 = tpu.matmul %7, %8, %cst_8 {dimension_numbers = #tpu.dot_dimension_numbers<[1], [0], [0], [1], [0, 0, 1, 1], [], []>} : vector<32x128xf32>, vector<128x128xf32>, vector<32x128xf32> -> vector<32x128xf32>
    %c0_9 = arith.constant 0 : index
    %c0_10 = arith.constant 0 : index
    %10 = vector.load %arg5[%c0_9, %c0_10] : memref<1x128xf32, #tpu.memory_space<vmem>>, vector<1x128xf32>
    %11 = vector.broadcast %10 : vector<1x128xf32> to vector<32x128xf32>
    %12 = arith.addf %9, %11 : vector<32x128xf32>
    %cst_11 = arith.constant 0.000000e+00 : f32
    %13 = vector.broadcast %cst_11 : f32 to vector<32x128xf32>
    %14 = arith.maximumf %12, %13 : vector<32x128xf32>
    %c0_12 = arith.constant 0 : index
    %c0_13 = arith.constant 0 : index
    %15 = vector.load %arg6[%c0_12, %c0_13] : memref<128x4xf32, #tpu.memory_space<vmem>>, vector<128x4xf32>
    %cst_14 = arith.constant dense<0.000000e+00> : vector<32x4xf32>
    %16 = tpu.matmul %14, %15, %cst_14 {dimension_numbers = #tpu.dot_dimension_numbers<[1], [0], [0], [1], [0, 0, 1, 1], [], []>} : vector<32x128xf32>, vector<128x4xf32>, vector<32x4xf32> -> vector<32x4xf32>
    %c0_15 = arith.constant 0 : index
    %c0_16 = arith.constant 0 : index
    %17 = vector.load %arg7[%c0_15, %c0_16] : memref<1x4xf32, #tpu.memory_space<vmem>>, vector<1x4xf32>
    %18 = vector.broadcast %17 : vector<1x4xf32> to vector<32x4xf32>
    %19 = arith.addf %16, %18 : vector<32x4xf32>
    %c0_17 = arith.constant 0 : index
    %c0_18 = arith.constant 0 : index
    %20 = vector.load %arg8[%c0_17, %c0_18] : memref<32x4xf32, #tpu.memory_space<vmem>>, vector<32x4xf32>
    tpu.vector_store %arg8[%c0_17, %c0_18], %19 {strides = array<i32>} : memref<32x4xf32, #tpu.memory_space<vmem>>, vector<32x4xf32>,
    return
  }
  func.func @transform_0(%arg0: i32) -> (i32, i32) {
    %c0_i32 = arith.constant 0 : i32
    %c0_i32_0 = arith.constant 0 : i32
    return %arg0, %c0_i32 : i32, i32
  }
  func.func @transform_1(%arg0: i32) -> (i32, i32) {
    %c0_i32 = arith.constant 0 : i32
    %c0_i32_0 = arith.constant 0 : i32
    %c0_i32_1 = arith.constant 0 : i32
    return %c0_i32, %c0_i32_0 : i32, i32
  }
  func.func @transform_2(%arg0: i32) -> (i32, i32) {
    %c0_i32 = arith.constant 0 : i32
    %c0_i32_0 = arith.constant 0 : i32
    %c0_i32_1 = arith.constant 0 : i32
    return %c0_i32, %c0_i32_0 : i32, i32
  }
  func.func @transform_3(%arg0: i32) -> (i32, i32) {
    %c0_i32 = arith.constant 0 : i32
    %c0_i32_0 = arith.constant 0 : i32
    %c0_i32_1 = arith.constant 0 : i32
    return %c0_i32, %c0_i32_0 : i32, i32
  }
  func.func @transform_4(%arg0: i32) -> (i32, i32) {
    %c0_i32 = arith.constant 0 : i32
    %c0_i32_0 = arith.constant 0 : i32
    %c0_i32_1 = arith.constant 0 : i32
    return %c0_i32, %c0_i32_0 : i32, i32
  }
  func.func @transform_5(%arg0: i32) -> (i32, i32) {
    %c0_i32 = arith.constant 0 : i32
    %c0_i32_0 = arith.constant 0 : i32
    %c0_i32_1 = arith.constant 0 : i32
    return %c0_i32, %c0_i32_0 : i32, i32
  }
  func.func @transform_6(%arg0: i32) -> (i32, i32) {
    %c0_i32 = arith.constant 0 : i32
    %c0_i32_0 = arith.constant 0 : i32
    %c0_i32_1 = arith.constant 0 : i32
    return %c0_i32, %c0_i32_0 : i32, i32
  }
  func.func @transform_7(%arg0: i32) -> (i32, i32) {
    %c0_i32 = arith.constant 0 : i32
    %c0_i32_0 = arith.constant 0 : i32
    return %arg0, %c0_i32 : i32, i32
  }
}

</mosaic_0001>

<llo_original>
// kernel: tpu_custom_call.1
$region0: #{tpu_custom_call.1}
  #allocation0 [shape = 'u32[]', space=smem, size = 0x4, offset = 0x4, fixed_abs, tag = 'smem constant byte address 0x4 - core index']
  #allocation1 [shape = 'u32[144,128]{1,0:T(1,128)}', space=vmem, size = 0x12000, scoped, tag = 'internal scratch']
  %s0 = inlined_call_operand.vmem [shape: f32[32,8], index: 0, kind: input, shape index: {}]
  %s1 = inlined_call_operand.vmem [shape: f32[8,128], index: 1, kind: input, shape index: {}]
  %s2 = inlined_call_operand.vmem [shape: f32[1,128], index: 2, kind: input, shape index: {}]
  %s3 = inlined_call_operand.vmem [shape: f32[128,128], index: 3, kind: input, shape index: {}]
  %s4 = inlined_call_operand.vmem [shape: f32[1,128], index: 4, kind: input, shape index: {}]
  %s5 = inlined_call_operand.vmem [shape: f32[128,4], index: 5, kind: input, shape index: {}]
  %s6 = inlined_call_operand.vmem [shape: f32[1,4], index: 6, kind: input, shape index: {}]
  %s7 = inlined_call_operand.vmem [shape: f32[32,4], index: 7, kind: output, shape index: {}]
  %s8 = sld [smem:[#allocation0]]
  $region38: #{tpu_custom_call.1} parent=0
    _
  %s10 = ssub.s32 1, %s8
  %s11 = scalar_select 0, %s10, %s8
  // Predicated region
  $region2: #{tpu_custom_call.1} parent=0 // pred_check
    _
  $region3: #{tpu_custom_call.1} parent=0 // pred_check_branch
    %13 = sbr.rel (0) target = $region5
  $region4: #{tpu_custom_call.1} parent=0 // pred_region
    _
  $region5: #{tpu_custom_call.1} parent=0 // pred_fallthru
    _
  // Predicated region
  $region6: #{tpu_custom_call.1} parent=0 // pred_check
    _
  $region7: #{tpu_custom_call.1} parent=0 // pred_check_branch
    %15 = sbr.rel (0) target = $region9
  $region8: #{tpu_custom_call.1} parent=0 // pred_region
    _
  $region9: #{tpu_custom_call.1} parent=0 // pred_fallthru
    _
  // Predicated region
  $region10: #{tpu_custom_call.1} parent=0 // pred_check
    _
  $region11: #{tpu_custom_call.1} parent=0 // pred_check_branch
    %17 = sbr.rel (0) target = $region13
  $region12: #{tpu_custom_call.1} parent=0 // pred_region
    _
  $region13: #{tpu_custom_call.1} parent=0 // pred_fallthru
    _
  // Predicated region
  $region14: #{tpu_custom_call.1} parent=0 // pred_check
    _
  $region15: #{tpu_custom_call.1} parent=0 // pred_check_branch
    %19 = sbr.rel (0) target = $region17
  $region16: #{tpu_custom_call.1} parent=0 // pred_region
    _
  $region17: #{tpu_custom_call.1} parent=0 // pred_fallthru
    _
  // Predicated region
  $region18: #{tpu_custom_call.1} parent=0 // pred_check
    _
  $region19: #{tpu_custom_call.1} parent=0 // pred_check_branch
    %21 = sbr.rel (0) target = $region21
  $region20: #{tpu_custom_call.1} parent=0 // pred_region
    _
  $region21: #{tpu_custom_call.1} parent=0 // pred_fallthru
    _
  // Predicated region
  $region22: #{tpu_custom_call.1} parent=0 // pred_check
    _
  $region23: #{tpu_custom_call.1} parent=0 // pred_check_branch
    %23 = sbr.rel (0) target = $region25
  $region24: #{tpu_custom_call.1} parent=0 // pred_region
    _
  $region25: #{tpu_custom_call.1} parent=0 // pred_fallthru
    _
  // Predicated region
  $region26: #{tpu_custom_call.1} parent=0 // pred_check
    _
  $region27: #{tpu_custom_call.1} parent=0 // pred_check_branch
    %25 = sbr.rel (0) target = $region29
  $region28: #{tpu_custom_call.1} parent=0 // pred_region
    _
  $region29: #{tpu_custom_call.1} parent=0 // pred_fallthru
    _
  %v26 = vld [vmem:[%s0] sm:$0xff]
  %v27 = vld [vmem:[%s0 + $0x8] sm:$0xff]
  %v28 = vld [vmem:[%s0 + $0x10] sm:$0xff]
  %v29 = vld [vmem:[%s0 + $0x18] sm:$0xff]
  %v30 = vld [vmem:[%s1] sm:$0xff]
  %v31 = vld [vmem:[%s2] sm:$0x1]
  %v33 = vlaneseq
  %v34 = vshrl.u32 %v33, 7
  %v35 = vsub.s32 0, %v34
  %v36 = vrot.slane %v31, %v35
  %vm38 = vcmask 64512
  %v40 = vsel %vm38, %v26, 0
  %v43 = vsel %vm38, %v27, 0
  %v46 = vsel %vm38, %v28, 0
  %v49 = vsel %vm38, %v29, 0
  %51 = vmatprep.subr.mxu0 0.0
  %52 = vmatpush1.msra.mxu0 %v30
  %53 = vmatprep.subr.mxu0 0.0
  %54 = vmatpush1.msra.mxu0 0.0
  %55 = vmatprep.subr.mxu0 0.0
  %56 = vmatpush1.msra.mxu0 0.0
  %57 = vmatprep.subr.mxu0 0.0
  %58 = vmatpush1.msra.mxu0 0.0
  %59 = vmatprep.subr.mxu0 0.0
  %60 = vmatpush1.msra.mxu0 0.0
  %61 = vmatprep.subr.mxu0 0.0
  %62 = vmatpush1.msra.mxu0 0.0
  %63 = vmatprep.subr.mxu0 0.0
  %64 = vmatpush1.msra.mxu0 0.0
  %65 = vmatprep.subr.mxu0 0.0
  %66 = vmatpush1.msra.mxu0 0.0
  %67 = vmatprep.subr.mxu0 0.0
  %68 = vmatpush1.msra.mxu0 0.0
  %69 = vmatprep.subr.mxu0 0.0
  %70 = vmatpush1.msra.mxu0 0.0
  %71 = vmatprep.subr.mxu0 0.0
  %72 = vmatpush1.msra.mxu0 0.0
  %73 = vmatprep.subr.mxu0 0.0
  %74 = vmatpush1.msra.mxu0 0.0
  %75 = vmatprep.subr.mxu0 0.0
  %76 = vmatpush1.msra.mxu0 0.0
  %77 = vmatprep.subr.mxu0 0.0
  %78 = vmatpush1.msra.mxu0 0.0
  %79 = vmatprep.subr.mxu0 0.0
  %80 = vmatpush1.msra.mxu0 0.0
  %81 = vmatprep.subr.mxu0 0.0
  %82 = vmatpush1.msra.mxu0 0.0
  %83 = vmatprep.subr.mxu0 0.0
  %84 = vmatpush1.msra.mxu0 0.0
  %85 = vmatprep.subr.mxu0 0.0
  %86 = vmatpush1.msra.mxu0 0.0
  %87 = vmatprep.subr.mxu0 0.0
  %88 = vmatpush1.msra.mxu0 0.0
  %89 = vmatprep.subr.mxu0 0.0
  %90 = vmatpush1.msra.mxu0 0.0
  %91 = vmatprep.subr.mxu0 0.0
  %92 = vmatpush1.msra.mxu0 0.0
  %93 = vmatprep.subr.mxu0 0.0
  %94 = vmatpush1.msra.mxu0 0.0
  %95 = vmatprep.subr.mxu0 0.0
  %96 = vmatpush1.msra.mxu0 0.0
  %97 = vmatprep.subr.mxu0 0.0
  %98 = vmatpush1.msra.mxu0 0.0
  %99 = vmatprep.subr.mxu0 0.0
  %100 = vmatpush1.msra.mxu0 0.0
  %101 = vmatprep.subr.mxu0 0.0
  %102 = vmatpush1.msra.mxu0 0.0
  %103 = vmatprep.subr.mxu0 0.0
  %104 = vmatpush1.msra.mxu0 0.0
  %105 = vmatprep.subr.mxu0 0.0
  %106 = vmatpush1.msra.mxu0 0.0
  %107 = vmatprep.subr.mxu0 0.0
  %108 = vmatpush1.msra.mxu0 0.0
  %109 = vmatprep.subr.mxu0 0.0
  %110 = vmatpush1.msra.mxu0 0.0
  %111 = vmatprep.subr.mxu0 0.0
  %112 = vmatpush1.msra.mxu0 0.0
  %113 = vmatprep.subr.mxu0 0.0
  %114 = vmatpush1.msra.mxu0 0.0
  %115 = vmatprep.mubr.f32.mxu0 0.0
  %116 = vmatmul.mubr.f32.gmra.mrb[0].mxu0 %v40
  %v117 = vpop.f32.mrb[0].mxu0
  %v118 = vadd.f32 %v36, %v117
  %v119 = vpop.f32.mrb[0].mxu0
  %120 = vmatprep.mubr.f32.mxu0 0.0
  %121 = vmatmul.mubr.f32.gmra.mrb[0].mxu0 %v43
  %v122 = vpop.f32.mrb[0].mxu0
  %v123 = vadd.f32 %v36, %v122
  %v124 = vpop.f32.mrb[0].mxu0
  %125 = vmatprep.mubr.f32.mxu0 0.0
  %126 = vmatmul.mubr.f32.gmra.mrb[0].mxu0 %v46
  %v127 = vpop.f32.mrb[0].mxu0
  %v128 = vadd.f32 %v36, %v127
  %v129 = vpop.f32.mrb[0].mxu0
  %130 = vmatprep.mubr.f32.mxu0 0.0
  %131 = vmatmul.mubr.f32.gmra.mrb[0].mxu0 %v49
  %v132 = vpop.f32.mrb[0].mxu0
  %v133 = vadd.f32 %v36, %v132
  %v134 = vpop.f32.mrb[0].mxu0
  %135 = vdwg.mxu0
  %v136 = vmax.f32 %v118, 0.0
  %v137 = vmax.f32 %v123, 0.0
  %v138 = vmax.f32 %v128, 0.0
  %v139 = vmax.f32 %v133, 0.0
  %v140 = vld [vmem:[%s3] sm:$0xff]
  %v141 = vld [vmem:[%s3 + $0x8] sm:$0xff]
  %v142 = vld [vmem:[%s3 + $0x10] sm:$0xff]
  %v143 = vld [vmem:[%s3 + $0x18] sm:$0xff]
  %v144 = vld [vmem:[%s3 + $0x20] sm:$0xff]
  %v145 = vld [vmem:[%s3 + $0x28] sm:$0xff]
  %v146 = vld [vmem:[%s3 + $0x30] sm:$0xff]
  %v147 = vld [vmem:[%s3 + $0x38] sm:$0xff]
  %v148 = vld [vmem:[%s3 + $0x40] sm:$0xff]
  %v149 = vld [vmem:[%s3 + $0x48] sm:$0xff]
  %v150 = vld [vmem:[%s3 + $0x50] sm:$0xff]
  %v151 = vld [vmem:[%s3 + $0x58] sm:$0xff]
  %v152 = vld [vmem:[%s3 + $0x60] sm:$0xff]
  %v153 = vld [vmem:[%s3 + $0x68] sm:$0xff]
  %v154 = vld [vmem:[%s3 + $0x70] sm:$0xff]
  %v155 = vld [vmem:[%s3 + $0x78] sm:$0xff]
  %v156 = vld [vmem:[%s4] sm:$0x1]
  %v158 = vlaneseq
  %v159 = vshrl.u32 %v158, 7
  %v160 = vsub.s32 0, %v159
  %v161 = vrot.slane %v156, %v160
  %163 = vmatprep.subr.mxu0 0.0
  %164 = vmatpush1.msra.mxu0 %v140
  %165 = vmatprep.subr.mxu0 0.0
  %166 = vmatpush1.msra.mxu0 %v141
  %167 = vmatprep.subr.mxu0 0.0
  %168 = vmatpush1.msra.mxu0 %v142
  %169 = vmatprep.subr.mxu0 0.0
  %170 = vmatpush1.msra.mxu0 %v143
  %171 = vmatprep.subr.mxu0 0.0
  %172 = vmatpush1.msra.mxu0 %v144
  %173 = vmatprep.subr.mxu0 0.0
  %174 = vmatpush1.msra.mxu0 %v145
  %175 = vmatprep.subr.mxu0 0.0
  %176 = vmatpush1.msra.mxu0 %v146
  %177 = vmatprep.subr.mxu0 0.0
  %178 = vmatpush1.msra.mxu0 %v147
  %179 = vmatprep.subr.mxu0 0.0
  %180 = vmatpush1.msra.mxu0 %v148
  %181 = vmatprep.subr.mxu0 0.0
  %182 = vmatpush1.msra.mxu0 %v149
  %183 = vmatprep.subr.mxu0 0.0
  %184 = vmatpush1.msra.mxu0 %v150
  %185 = vmatprep.subr.mxu0 0.0
  %186 = vmatpush1.msra.mxu0 %v151
  %187 = vmatprep.subr.mxu0 0.0
  %188 = vmatpush1.msra.mxu0 %v152
  %189 = vmatprep.subr.mxu0 0.0
  %190 = vmatpush1.msra.mxu0 %v153
  %191 = vmatprep.subr.mxu0 0.0
  %192 = vmatpush1.msra.mxu0 %v154
  %193 = vmatprep.subr.mxu0 0.0
  %194 = vmatpush1.msra.mxu0 %v155
  %195 = vmatprep.subr.mxu0 0.0
  %196 = vmatpush1.msra.mxu0 0.0
  %197 = vmatprep.subr.mxu0 0.0
  %198 = vmatpush1.msra.mxu0 0.0
  %199 = vmatprep.subr.mxu0 0.0
  %200 = vmatpush1.msra.mxu0 0.0
  %201 = vmatprep.subr.mxu0 0.0
  %202 = vmatpush1.msra.mxu0 0.0
  %203 = vmatprep.subr.mxu0 0.0
  %204 = vmatpush1.msra.mxu0 0.0
  %205 = vmatprep.subr.mxu0 0.0
  %206 = vmatpush1.msra.mxu0 0.0
  %207 = vmatprep.subr.mxu0 0.0
  %208 = vmatpush1.msra.mxu0 0.0
  %209 = vmatprep.subr.mxu0 0.0
  %210 = vmatpush1.msra.mxu0 0.0
  %211 = vmatprep.subr.mxu0 0.0
  %212 = vmatpush1.msra.mxu0 0.0
  %213 = vmatprep.subr.mxu0 0.0
  %214 = vmatpush1.msra.mxu0 0.0
  %215 = vmatprep.subr.mxu0 0.0
  %216 = vmatpush1.msra.mxu0 0.0
  %217 = vmatprep.subr.mxu0 0.0
  %218 = vmatpush1.msra.mxu0 0.0
  %219 = vmatprep.subr.mxu0 0.0
  %220 = vmatpush1.msra.mxu0 0.0
  %221 = vmatprep.subr.mxu0 0.0
  %222 = vmatpush1.msra.mxu0 0.0
  %223 = vmatprep.subr.mxu0 0.0
  %224 = vmatpush1.msra.mxu0 0.0
  %225 = vmatprep.subr.mxu0 0.0
  %226 = vmatpush1.msra.mxu0 0.0
  %227 = vmatprep.mubr.f32.mxu0 0.0
  %228 = vmatmul.mubr.f32.gmra.mrb[0].mxu0 %v136
  %v229 = vpop.f32.mrb[0].mxu0
  %v230 = vadd.f32 %v161, %v229
  %v231 = vpop.f32.mrb[0].mxu0
  %232 = vmatprep.mubr.f32.mxu0 0.0
  %233 = vmatmul.mubr.f32.gmra.mrb[0].mxu0 %v137
  %v234 = vpop.f32.mrb[0].mxu0
  %v235 = vadd.f32 %v161, %v234
  %v236 = vpop.f32.mrb[0].mxu0
  %237 = vmatprep.mubr.f32.mxu0 0.0
  %238 = vmatmul.mubr.f32.gmra.mrb[0].mxu0 %v138
  %v239 = vpop.f32.mrb[0].mxu0
  %v240 = vadd.f32 %v161, %v239
  %v241 = vpop.f32.mrb[0].mxu0
  %242 = vmatprep.mubr.f32.mxu0 0.0
  %243 = vmatmul.mubr.f32.gmra.mrb[0].mxu0 %v139
  %v244 = vpop.f32.mrb[0].mxu0
  %v245 = vadd.f32 %v161, %v244
  %v246 = vpop.f32.mrb[0].mxu0
  %247 = vdwg.mxu0
  %v248 = vmax.f32 %v230, 0.0
  %v249 = vmax.f32 %v235, 0.0
  %v250 = vmax.f32 %v240, 0.0
  %v251 = vmax.f32 %v245, 0.0
  %v252 = vld [vmem:[%s5] sm:$0xff]
  %v253 = vld [vmem:[%s5 + $0x8] sm:$0xff]
  %v254 = vld [vmem:[%s5 + $0x10] sm:$0xff]
  %v255 = vld [vmem:[%s5 + $0x18] sm:$0xff]
  %v256 = vld [vmem:[%s5 + $0x20] sm:$0xff]
  %v257 = vld [vmem:[%s5 + $0x28] sm:$0xff]
  %v258 = vld [vmem:[%s5 + $0x30] sm:$0xff]
  %v259 = vld [vmem:[%s5 + $0x38] sm:$0xff]
  %v260 = vld [vmem:[%s5 + $0x40] sm:$0xff]
  %v261 = vld [vmem:[%s5 + $0x48] sm:$0xff]
  %v262 = vld [vmem:[%s5 + $0x50] sm:$0xff]
  %v263 = vld [vmem:[%s5 + $0x58] sm:$0xff]
  %v264 = vld [vmem:[%s5 + $0x60] sm:$0xff]
  %v265 = vld [vmem:[%s5 + $0x68] sm:$0xff]
  %v266 = vld [vmem:[%s5 + $0x70] sm:$0xff]
  %v267 = vld [vmem:[%s5 + $0x78] sm:$0xff]
  %v268 = vld [vmem:[%s6] sm:$0x1]
  %v270 = vlaneseq
  %v271 = vshrl.u32 %v270, 7
  %v272 = vsub.s32 0, %v271
  %v273 = vrot.slane %v268, %v272
  %275 = vmatprep.subr.mxu0 0.0
  %276 = vmatpush1.msra.mxu0 %v252
  %277 = vmatprep.subr.mxu0 0.0
  %278 = vmatpush1.msra.mxu0 %v253
  %279 = vmatprep.subr.mxu0 0.0
  %280 = vmatpush1.msra.mxu0 %v254
  %281 = vmatprep.subr.mxu0 0.0
  %282 = vmatpush1.msra.mxu0 %v255
  %283 = vmatprep.subr.mxu0 0.0
  %284 = vmatpush1.msra.mxu0 %v256
  %285 = vmatprep.subr.mxu0 0.0
  %286 = vmatpush1.msra.mxu0 %v257
  %287 = vmatprep.subr.mxu0 0.0
  %288 = vmatpush1.msra.mxu0 %v258
  %289 = vmatprep.subr.mxu0 0.0
  %290 = vmatpush1.msra.mxu0 %v259
  %291 = vmatprep.subr.mxu0 0.0
  %292 = vmatpush1.msra.mxu0 %v260
  %293 = vmatprep.subr.mxu0 0.0
  %294 = vmatpush1.msra.mxu0 %v261
  %295 = vmatprep.subr.mxu0 0.0
  %296 = vmatpush1.msra.mxu0 %v262
  %297 = vmatprep.subr.mxu0 0.0
  %298 = vmatpush1.msra.mxu0 %v263
  %299 = vmatprep.subr.mxu0 0.0
  %300 = vmatpush1.msra.mxu0 %v264
  %301 = vmatprep.subr.mxu0 0.0
  %302 = vmatpush1.msra.mxu0 %v265
  %303 = vmatprep.subr.mxu0 0.0
  %304 = vmatpush1.msra.mxu0 %v266
  %305 = vmatprep.subr.mxu0 0.0
  %306 = vmatpush1.msra.mxu0 %v267
  %307 = vmatprep.subr.mxu0 0.0
  %308 = vmatpush1.msra.mxu0 0.0
  %309 = vmatprep.subr.mxu0 0.0
  %310 = vmatpush1.msra.mxu0 0.0
  %311 = vmatprep.subr.mxu0 0.0
  %312 = vmatpush1.msra.mxu0 0.0
  %313 = vmatprep.subr.mxu0 0.0
  %314 = vmatpush1.msra.mxu0 0.0
  %315 = vmatprep.subr.mxu0 0.0
  %316 = vmatpush1.msra.mxu0 0.0
  %317 = vmatprep.subr.mxu0 0.0
  %318 = vmatpush1.msra.mxu0 0.0
  %319 = vmatprep.subr.mxu0 0.0
  %320 = vmatpush1.msra.mxu0 0.0
  %321 = vmatprep.subr.mxu0 0.0
  %322 = vmatpush1.msra.mxu0 0.0
  %323 = vmatprep.subr.mxu0 0.0
  %324 = vmatpush1.msra.mxu0 0.0
  %325 = vmatprep.subr.mxu0 0.0
  %326 = vmatpush1.msra.mxu0 0.0
  %327 = vmatprep.subr.mxu0 0.0
  %328 = vmatpush1.msra.mxu0 0.0
  %329 = vmatprep.subr.mxu0 0.0
  %330 = vmatpush1.msra.mxu0 0.0
  %331 = vmatprep.subr.mxu0 0.0
  %332 = vmatpush1.msra.mxu0 0.0
  %333 = vmatprep.subr.mxu0 0.0
  %334 = vmatpush1.msra.mxu0 0.0
  %335 = vmatprep.subr.mxu0 0.0
  %336 = vmatpush1.msra.mxu0 0.0
  %337 = vmatprep.subr.mxu0 0.0
  %338 = vmatpush1.msra.mxu0 0.0
  %339 = vmatprep.mubr.f32.mxu0 0.0
  %340 = vmatmul.mubr.f32.gmra.mrb[0].mxu0 %v248
  %v341 = vpop.f32.mrb[0].mxu0
  %v342 = vadd.f32 %v273, %v341
  %v343 = vpop.f32.mrb[0].mxu0
  %344 = vmatprep.mubr.f32.mxu0 0.0
  %345 = vmatmul.mubr.f32.gmra.mrb[0].mxu0 %v249
  %v346 = vpop.f32.mrb[0].mxu0
  %v347 = vadd.f32 %v273, %v346
  %v348 = vpop.f32.mrb[0].mxu0
  %349 = vmatprep.mubr.f32.mxu0 0.0
  %350 = vmatmul.mubr.f32.gmra.mrb[0].mxu0 %v250
  %v351 = vpop.f32.mrb[0].mxu0
  %v352 = vadd.f32 %v273, %v351
  %v353 = vpop.f32.mrb[0].mxu0
  %354 = vmatprep.mubr.f32.mxu0 0.0
  %355 = vmatmul.mubr.f32.gmra.mrb[0].mxu0 %v251
  %v356 = vpop.f32.mrb[0].mxu0
  %v357 = vadd.f32 %v273, %v356
  %v358 = vpop.f32.mrb[0].mxu0
  %359 = vdwg.mxu0
  %vm360 = vcmask 31744
  %361 = vst.msk [vmem:[%s7] sm:$0xff] %vm360, %v342
  %362 = vst.msk [vmem:[%s7 + $0x8] sm:$0xff] %vm360, %v347
  %363 = vst.msk [vmem:[%s7 + $0x10] sm:$0xff] %vm360, %v352
  %364 = vst.msk [vmem:[%s7 + $0x18] sm:$0xff] %vm360, %v357
  // Predicated region
  $region30: #{tpu_custom_call.1} parent=0 // pred_check
    _
  $region31: #{tpu_custom_call.1} parent=0 // pred_check_branch
    %366 = sbr.rel (0) target = $region33
  $region32: #{tpu_custom_call.1} parent=0 // pred_region
    _
  $region33: #{tpu_custom_call.1} parent=0 // pred_fallthru
    _
  // Predicated region
  $region34: #{tpu_custom_call.1} parent=0 // pred_check
    _
  $region35: #{tpu_custom_call.1} parent=0 // pred_check_branch
    %368 = sbr.rel (0) target = $region37
  $region36: #{tpu_custom_call.1} parent=0 // pred_region
    _
  $region37: #{tpu_custom_call.1} parent=0 // pred_fallthru
    _

</llo_original>
